<compile_context>
chip_gen: v7x
topology: tpu7x:2x2x1
jax: 0.10.0
libtpu: 0.0.40
codegen_flags: <defaults>
</compile_context>

<pallas_src>
import functools

import jax
import jax.numpy as jnp
from jax import lax
from jax.experimental import pallas as pl
from jax.experimental.pallas import tpu as pltpu

_LANES = 128
_SUBLANES = 8
_MAX_TILE_ROWS = 2048   # 2048 * 128 * 4 B = 1 MiB per f32 input block (sweep 2048-4096 on v7x)


def _round_up(x: int, m: int) -> int:
    return ((x + m - 1) // m) * m


def _static_pow(x, gamma: float):
    """x**gamma; small integer gamma specialized to VPU multiplies (no EUP exp/log)."""
    g = float(gamma)
    if g == 0.0:
        return jnp.ones_like(x)
    if g.is_integer() and 0.0 < g <= 8.0:
        r = x
        for _ in range(int(g) - 1):
            r = r * x
        return r
    return jnp.power(x, jnp.float32(g))


def _focal_sum_kernel(p_ref, t_ref, out_ref, *, gamma: float, tile_rows: int,
                      n_tiles: int, tail_valid: int, hard_targets: bool):
    ti = pl.program_id(0)

    @pl.when(ti == 0)
    def _init():
        out_ref[...] = jnp.zeros_like(out_ref)

    p = p_ref[...].astype(jnp.float32)        # (tile_rows, 128)
    tgt = t_ref[...].astype(jnp.float32)

    if hard_targets:
        # Exact rewrite for 0/1 targets: 1 log/element, ~half the VALU ops.
        pt = jnp.where(tgt > 0.5, p, 1.0 - p)
        loss = _static_pow(1.0 - pt, gamma) * jnp.log(pt)
    else:
        # General (soft-label) two-term form, identical to the PyTorch reference.
        loss = (tgt * _static_pow(1.0 - p, gamma) * jnp.log(p)
                + (1.0 - tgt) * _static_pow(p, gamma) * jnp.log(1.0 - p))

    def fold(x):
        # VPU-only partial reduction: (tile_rows, 128) -> (8, 128), layout-friendly.
        return x.reshape(tile_rows // _SUBLANES, _SUBLANES, _LANES).sum(axis=0)

    tile_elems = tile_rows * _LANES
    has_tail = tail_valid < tile_elems        # static Python bool

    if not has_tail:
        out_ref[...] += fold(loss)
    else:
        def masked_fold():
            row = lax.broadcasted_iota(jnp.int32, (tile_rows, _LANES), 0)
            lane = lax.broadcasted_iota(jnp.int32, (tile_rows, _LANES), 1)
            idx = row * _LANES + lane
            return fold(jnp.where(idx < tail_valid, loss, 0.0))

        if n_tiles == 1:
            out_ref[...] += masked_fold()
        else:
            @pl.when(ti != n_tiles - 1)
            def _full_tile():
                out_ref[...] += fold(loss)

            @pl.when(ti == n_tiles - 1)
            def _tail_tile():
                out_ref[...] += masked_fold()


def _focal_loss_sum(probs, targets, gamma: float, hard_targets: bool):
    """Sum over all elements of  t*(1-p)^g*log(p) + (1-t)*p^g*log(1-p)  for one scale."""
    n = int(probs.size)
    rows_exact = -(-n // _LANES)

    p_flat = jnp.ravel(probs)                 # bitcast reshape (contiguous) -> no copy
    t_flat = jnp.ravel(targets)

    if n == rows_exact * _LANES:
        rows = rows_exact                     # fully zero-copy staging
    else:
        rows = _round_up(rows_exact, _SUBLANES)
        pad = rows * _LANES - n
        # TODO(synk): ragged tails still cost one pad copy of this scale; a manual-DMA
        # (memory_space=pl.ANY) path could avoid even that.
        p_flat = jnp.pad(p_flat, (0, pad))
        t_flat = jnp.pad(t_flat, (0, pad))

    p2 = p_flat.reshape(rows, _LANES)
    t2 = t_flat.reshape(rows, _LANES)

    tile_rows = min(_MAX_TILE_ROWS, _round_up(rows, _SUBLANES))
    tile_elems = tile_rows * _LANES
    n_tiles = -(-rows // tile_rows)
    tail_valid = n - (n_tiles - 1) * tile_elems   # static; == tile_elems when no tail

    kernel = functools.partial(
        _focal_sum_kernel, gamma=float(gamma), tile_rows=tile_rows,
        n_tiles=n_tiles, tail_valid=tail_valid, hard_targets=bool(hard_targets))

    out = pl.pallas_call(
        kernel,
        out_shape=jax.ShapeDtypeStruct((_SUBLANES, _LANES), jnp.float32),
        grid=(n_tiles,),
        in_specs=[
            pl.BlockSpec((tile_rows, _LANES), lambda i: (i, 0)),
            pl.BlockSpec((tile_rows, _LANES), lambda i: (i, 0)),
        ],
        out_specs=pl.BlockSpec((_SUBLANES, _LANES), lambda i: (0, 0)),
        compiler_params=pltpu.CompilerParams(
            dimension_semantics=("arbitrary",),
            vmem_limit_bytes=32 * 1024 * 1024,
        ),
    )(p2, t2)

    return jnp.sum(out)


# ------------------------- module wrapper -------------------------

class BinaryFocalLoss:
    """JAX/Pallas port of the PyTorch BinaryFocalLoss module (forward pass).

    hard_targets=True (default) assumes 0/1 targets and uses the equivalent single-log form;
    pass hard_targets=False for exact soft-label semantics of the reference expression.
    """

    def __init__(self, gamma: float = 2.0, auto_weight: bool = False, scales=(0,),
                 hard_targets: bool = True):
        self._gamma = float(gamma)
        self._auto_weight = auto_weight
        self._scales = list(scales)
        self._hard_targets = bool(hard_targets)
        self._ws = {}
        for scale in self._scales:
            if self._auto_weight:
                # TODO(synk): nn.Parameter/ParameterDict training state not modeled; plain zero-init array.
                self._ws["loss_w_s{}".format(scale)] = jnp.zeros((1,), jnp.float32)
            else:
                self._ws["loss_w_s{}".format(scale)] = 1.0

    def __call__(self, inputs: dict, targets: dict):
        loss_acc = jnp.float32(0.0)
        for scale in inputs.keys():
            n = int(inputs[scale].size)
            s = _focal_loss_sum(inputs[scale], targets[scale], self._gamma, self._hard_targets)
            mean_loss = -s / jnp.float32(n)          # negation folded into the cheap epilogue
            w = self._ws["loss_w_s{}".format(scale)]
            if self._auto_weight:
                loss_acc = loss_acc + mean_loss * jnp.exp(-w[0]) + w[0]
            else:
                loss_acc = loss_acc + mean_loss * w
        return loss_acc


# ------------------------- demo / smoke test -------------------------

if __name__ == "__main__":
    key = jax.random.PRNGKey(0)
    k1, k2, k3, k4 = jax.random.split(key, 4)

    # Two scales of NCHW probabilities/targets; the second scale is NOT a multiple of 128 elements,
    # exercising the ragged-tail pad + gated-mask path.
    shape0 = (2, 4, 16, 16)   # 2048 elements -> fully zero-copy staging
    shape1 = (2, 4, 9, 9)     #  648 elements -> small pad + masked tail tile

    def make(shape, kp, kt):
        p = jax.nn.sigmoid(jax.random.normal(kp, shape, jnp.float32))
        p = jnp.clip(p, 1e-4, 1.0 - 1e-4)   # keep log() finite for the reference comparison
        t = (jax.random.uniform(kt, shape) > 0.5).astype(jnp.float32)
        return p, t

    p0, t0 = make(shape0, k1, k2)
    p1, t1 = make(shape1, k3, k4)

    # pure-JAX reference (un-clamped PyTorch expression)
    def ref_mean(p, t, g):
        loss = t * (1.0 - p) ** g * jnp.log(p) + (1.0 - t) * p ** g * jnp.log(1.0 - p)
        return jnp.mean(-loss)

    ref = ref_mean(p0, t0, 2.0) + ref_mean(p1, t1, 2.0)

    # Fast hard-target path (default).
    loss_hard = BinaryFocalLoss(gamma=2.0, auto_weight=False, scales=[0, 1])
    out_hard = jax.block_until_ready(loss_hard({0: p0, 1: p1}, {0: t0, 1: t1}))
    assert jnp.allclose(out_hard, ref, rtol=1e-5, atol=1e-6), (out_hard, ref)

    # Exact soft-label path (same result for 0/1 targets).
    loss_soft = BinaryFocalLoss(gamma=2.0, auto_weight=False, scales=[0, 1], hard_targets=False)
    out_soft = jax.block_until_ready(loss_soft({0: p0, 1: p1}, {0: t0, 1: t1}))
    assert jnp.allclose(out_soft, ref, rtol=1e-5, atol=1e-6), (out_soft, ref)

    print("KERNEL_OK")
</pallas_src>

<mosaic_0001>
module attributes {stable_mosaic.version = 11 : i64} {
  func.func @_focal_sum_kernel(%arg0: i32, %arg1: memref<16x128xf32, #tpu.memory_space<vmem>>, %arg2: memref<16x128xf32, #tpu.memory_space<vmem>>, %arg3: memref<8x128xf32, #tpu.memory_space<vmem>>) attributes {dimension_semantics = [#tpu.dimension_semantics<arbitrary>], iteration_bounds = array<i64: 1>, scalar_prefetch = 0 : i64, scratch_operands = 0 : i64, tpu.core_type = #tpu.core_type<tc>, window_params = [{transform_indices = @transform_0, window_bounds = array<i64: 16, 128>}, {transform_indices = @transform_1, window_bounds = array<i64: 16, 128>}, {pipeline_mode = #tpu.pipeline_mode<synchronous>, transform_indices = @transform_2, window_bounds = array<i64: 8, 128>}]} {
    %c0_i32 = arith.constant 0 : i32
    %0 = arith.cmpi eq, %arg0, %c0_i32 : i32
    %1 = arith.extui %0 : i1 to i32
    %c0_i32_0 = arith.constant 0 : i32
    %2 = arith.cmpi ne, %1, %c0_i32_0 : i32
    scf.if %2 {
      %cst_11 = arith.constant 0.000000e+00 : f32
      %20 = vector.broadcast %cst_11 : f32 to vector<8x128xf32>
      %c0_12 = arith.constant 0 : index
      %c0_13 = arith.constant 0 : index
      %21 = vector.load %arg3[%c0_12, %c0_13] : memref<8x128xf32, #tpu.memory_space<vmem>>, vector<8x128xf32>
      tpu.vector_store %arg3[%c0_12, %c0_13], %20 {strides = array<i32>} : memref<8x128xf32, #tpu.memory_space<vmem>>, vector<8x128xf32>,
    } else {
    }
    %c0 = arith.constant 0 : index
    %c0_1 = arith.constant 0 : index
    %3 = vector.load %arg1[%c0, %c0_1] : memref<16x128xf32, #tpu.memory_space<vmem>>, vector<16x128xf32>
    %c0_2 = arith.constant 0 : index
    %c0_3 = arith.constant 0 : index
    %4 = vector.load %arg2[%c0_2, %c0_3] : memref<16x128xf32, #tpu.memory_space<vmem>>, vector<16x128xf32>
    %cst = arith.constant 5.000000e-01 : f32
    %5 = vector.broadcast %cst : f32 to vector<16x128xf32>
    %6 = arith.cmpf ogt, %4, %5 : vector<16x128xf32>
    %cst_4 = arith.constant 1.000000e+00 : f32
    %7 = vector.broadcast %cst_4 : f32 to vector<16x128xf32>
    %8 = arith.subf %7, %3 : vector<16x128xf32>
    %9 = arith.select %6, %3, %8 : vector<16x128xi1>, vector<16x128xf32>
    %cst_5 = arith.constant 1.000000e+00 : f32
    %10 = vector.broadcast %cst_5 : f32 to vector<16x128xf32>
    %11 = arith.subf %10, %9 : vector<16x128xf32>
    %12 = arith.mulf %11, %11 : vector<16x128xf32>
    %13 = math.log %9 : vector<16x128xf32>
    %14 = arith.mulf %12, %13 : vector<16x128xf32>
    %c0_6 = arith.constant 0 : index
    %c0_7 = arith.constant 0 : index
    %15 = vector.load %arg3[%c0_6, %c0_7] : memref<8x128xf32, #tpu.memory_space<vmem>>, vector<8x128xf32>
    %16 = vector.shape_cast %14 : vector<16x128xf32> to vector<2x8x128xf32>
    %cst_8 = arith.constant dense<0.000000e+00> : vector<8x128xf32>
    %17 = vector.multi_reduction <add>, %16, %cst_8 [0] : vector<2x8x128xf32> to vector<8x128xf32>
    %18 = arith.addf %15, %17 : vector<8x128xf32>
    %c0_9 = arith.constant 0 : index
    %c0_10 = arith.constant 0 : index
    %19 = vector.load %arg3[%c0_9, %c0_10] : memref<8x128xf32, #tpu.memory_space<vmem>>, vector<8x128xf32>
    tpu.vector_store %arg3[%c0_9, %c0_10], %18 {strides = array<i32>} : memref<8x128xf32, #tpu.memory_space<vmem>>, vector<8x128xf32>,
    return
  }
  func.func @transform_0(%arg0: i32) -> (i32, i32) {
    %c0_i32 = arith.constant 0 : i32
    %c0_i32_0 = arith.constant 0 : i32
    return %arg0, %c0_i32 : i32, i32
  }
  func.func @transform_1(%arg0: i32) -> (i32, i32) {
    %c0_i32 = arith.constant 0 : i32
    %c0_i32_0 = arith.constant 0 : i32
    return %arg0, %c0_i32 : i32, i32
  }
  func.func @transform_2(%arg0: i32) -> (i32, i32) {
    %c0_i32 = arith.constant 0 : i32
    %c0_i32_0 = arith.constant 0 : i32
    %c0_i32_1 = arith.constant 0 : i32
    return %c0_i32, %c0_i32_0 : i32, i32
  }
}

</mosaic_0001>

<llo_original>
// kernel: tpu_custom_call.1
$region0: #{tpu_custom_call.1}
  #allocation0 [shape = 'u32[]', space=smem, size = 0x4, offset = 0x4, fixed_abs, tag = 'smem constant byte address 0x4 - core index']
  #allocation1 [shape = 'u32[144,128]{1,0:T(1,128)}', space=vmem, size = 0x12000, scoped, tag = 'internal scratch']
  %s0 = inlined_call_operand.hbm [shape: f32[16,128], index: 0, kind: input, shape index: {}]
  %s1 = inlined_call_operand.hbm [shape: f32[16,128], index: 1, kind: input, shape index: {}]
  %s2 = inlined_call_operand.hbm [shape: f32[8,128], index: 2, kind: output, shape index: {}]
  %s3 = sld [smem:[#allocation0]]
  $region30: #{tpu_custom_call.1} parent=0
    _
  %s5 = ssub.s32 1, %s3
  %s6 = scalar_select 0, %s5, %s3
  $region1: #{tpu_custom_call.1} parent=0
    #allocation2 [shape = 'u8[8192]{0}', space=vmem, size = 0x2000, scoped, tag = 'input window, operand 0, single buffered']
    #allocation3 [shape = 's32[1]{0}', space=sflag, size = 0x4, scoped, tag = 'scoped memory for tpu_custom_call.1']
    #allocation4 [shape = 's32[1]{0}', space=sflag, size = 0x4, scoped, tag = 'scoped memory for tpu_custom_call.1']
    #allocation5 [shape = 'u8[8192]{0}', space=vmem, size = 0x2000, scoped, tag = 'input window, operand 1, single buffered']
    #allocation6 [shape = 's32[1]{0}', space=sflag, size = 0x4, scoped, tag = 'scoped memory for tpu_custom_call.1']
    #allocation7 [shape = 'u8[4096]{0}', space=vmem, size = 0x1000, scoped, tag = 'output window, operand 0, single buffered']
    %7 = vsyncpa [#allocation3], 0
    %8 = vsyncpa [#allocation6], 0
    %9 = vsyncpa [#allocation4], 0
    // Predicated region
    $region2: #{tpu_custom_call.1} parent=1 // pred_check
      _
    $region3: #{tpu_custom_call.1} parent=1 // pred_check_branch
      %11 = sbr.rel (0) target = $region5
    $region4: #{tpu_custom_call.1} parent=1 // pred_region
      %s13 = ssub.s32 256, 256
      %14 = vsyncadd [#allocation3], %s13
      %s15 = sshll.u32 [#allocation2], 4
      %s16 = int_to_ptr.vmem [resolvable:$true] %s15
      %21 = dma.hbm_to_vmem [thread:$0]  %s0, 256, %s16, [#allocation3], 128, 128, 8
    $region5: #{tpu_custom_call.1} parent=1 // pred_fallthru
      _
    // Predicated region
    $region6: #{tpu_custom_call.1} parent=1 // pred_check
      _
    $region7: #{tpu_custom_call.1} parent=1 // pred_check_branch
      %23 = sbr.rel (0) target = $region9
    $region8: #{tpu_custom_call.1} parent=1 // pred_region
      %s25 = ssub.s32 256, 256
      %26 = vsyncadd [#allocation6], %s25
      %s27 = sshll.u32 [#allocation5], 4
      %s28 = int_to_ptr.vmem [resolvable:$true] %s27
      %33 = dma.hbm_to_vmem [thread:$0]  %s1, 256, %s28, [#allocation6], 128, 128, 8
    $region9: #{tpu_custom_call.1} parent=1 // pred_fallthru
      _
    // Predicated region
    $region10: #{tpu_custom_call.1} parent=1 // pred_check
      _
    $region11: #{tpu_custom_call.1} parent=1 // pred_check_branch
      %35 = sbr.rel (0) target = $region13
    $region12: #{tpu_custom_call.1} parent=1 // pred_region
      %36 = dma.done [#allocation3], 256
    $region13: #{tpu_custom_call.1} parent=1 // pred_fallthru
      _
    // Predicated region
    $region14: #{tpu_custom_call.1} parent=1 // pred_check
      _
    $region15: #{tpu_custom_call.1} parent=1 // pred_check_branch
      %38 = sbr.rel (0) target = $region17
    $region16: #{tpu_custom_call.1} parent=1 // pred_region
      %39 = dma.done [#allocation6], 256
    $region17: #{tpu_custom_call.1} parent=1 // pred_fallthru
      _
    %p40 = scmp.eq.s32.totalorder 0, 0
    // Predicated region
    $region18: #{tpu_custom_call.1} parent=1 // pred_check
      %p41 = pneg %p40
    $region19: #{tpu_custom_call.1} parent=1 // pred_check_branch
      %43 = sbr.rel (%p41) target = $region21
    $region20: #{tpu_custom_call.1} parent=1 // pred_region
      %44 = vst [vmem:[#allocation7] sm:$0xff] 0.0
    $region21: #{tpu_custom_call.1} parent=1 // pred_fallthru
      _
    %v45 = vld [vmem:[#allocation2] sm:$0xff]
    %v46 = vld [vmem:[#allocation2 + $0x8] sm:$0xff]
    %v47 = vld [vmem:[#allocation5] sm:$0xff]
    %v48 = vld [vmem:[#allocation5 + $0x8] sm:$0xff]
    %vm49 = vcmp.gt.f32.partialorder %v47, 0.5
    %vm50 = vcmp.gt.f32.partialorder %v48, 0.5
    %v51 = vsub.f32 1.0, %v45
    %v52 = vsub.f32 1.0, %v46
    %v53 = vsel %vm49, %v45, %v51
    %v54 = vsel %vm50, %v46, %v52
    %v55 = vsub.f32 1.0, %v53
    %v56 = vsub.f32 1.0, %v54
    %v57 = vmul.f32 %v55, %v55
    %v58 = vmul.f32 %v56, %v56
    %v59 = vlog2.pop %v53
    %v60 = vmul.f32 %v59, 0.6931472
    %v61 = vlog2.pop %v54
    %v62 = vmul.f32 %v61, 0.6931472
    %v63 = vmul.f32 %v57, %v60
    %v64 = vmul.f32 %v58, %v62
    %v65 = vld [vmem:[#allocation7] sm:$0xff]
    %v66 = vadd.f32 %v63, %v64
    %v67 = vadd.f32 %v65, %v66
    %68 = vst [vmem:[#allocation7] sm:$0xff] %v67
    // Predicated region
    $region22: #{tpu_custom_call.1} parent=1 // pred_check
      _
    $region23: #{tpu_custom_call.1} parent=1 // pred_check_branch
      %70 = sbr.rel (0) target = $region25
    $region24: #{tpu_custom_call.1} parent=1 // pred_region
      %s72 = ssub.s32 128, 128
      %73 = vsyncadd [#allocation4], %s72
      %s75 = sshll.u32 [#allocation7], 4
      %s76 = int_to_ptr.vmem [resolvable:$true] %s75
      %78 = dma.vmem_to_hbm [thread:$0]  %s76, 128, %s2, [#allocation4]
    $region25: #{tpu_custom_call.1} parent=1 // pred_fallthru
      _
    // Predicated region
    $region26: #{tpu_custom_call.1} parent=1 // pred_check
      _
    $region27: #{tpu_custom_call.1} parent=1 // pred_check_branch
      %80 = sbr.rel (0) target = $region29
    $region28: #{tpu_custom_call.1} parent=1 // pred_region
      %81 = dma.done [#allocation4], 128
    $region29: #{tpu_custom_call.1} parent=1 // pred_fallthru
      _
    %82 = vsyncpa [#allocation3], 1
    %83 = vsyncpa [#allocation6], 1
    %84 = vsyncpa [#allocation4], 1

</llo_original>
